<compile_context>
chip_gen: v7x
topology: tpu7x:2x2x1
jax: 0.10.0
libtpu: 0.0.40
codegen_flags: <defaults>
</compile_context>

<pallas_src>
import functools

import jax
import jax.numpy as jnp
from jax.experimental import pallas as pl
from jax.experimental.pallas import tpu as pltpu


# Leading "parallel" grid axis: ~2x on v7x (2 TensorCores/chip); on v5e/v6e the
# extra axis just iterates serially with negligible overhead.
NUM_CORE_SPLITS = 2


def _kge_moments_kernel(x0_ref, x3_ref, t_ref, acc_ref, *,
                        n_rows, tile_n, blocks_per_core, h):
    """Accumulate raw moments (Σp, Σp², Σp·t) over one (tile_n, H) row tile.

    x0_ref, x3_ref: (tile_n, H) VMEM tiles of yPred[0] / yPred[3]
    t_ref:          (tile_n, 1) VMEM tile of yTrue
    acc_ref:        (1, 8, 128) f32 per-core accumulator, resident across the
                    inner grid axis (lanes 0..2 of sublane 0 hold the moments).
    """
    c = pl.program_id(0)
    i = pl.program_id(1)

    @pl.when(i == 0)
    def _init():
        acc_ref[...] = jnp.zeros_like(acc_ref)

    # Global row-block index of this step.  The input index_map clamps it to
    # the last in-range block; fully out-of-range steps are masked to zero.
    g = c * blocks_per_core + i
    rem = n_rows - g * tile_n  # number of valid rows in this block (may be <=0)

    x0 = x0_ref[...].astype(jnp.float32)
    x3 = x3_ref[...].astype(jnp.float32)
    t = t_ref[...].astype(jnp.float32)

    row_id = jax.lax.broadcasted_iota(jnp.int32, (tile_n, 1), 0)
    mask = row_id < rem                      # (tile_n, 1); broadcasts over lanes

    z = jnp.where(mask, x0 * x3, 0.0)        # masked dense product tile
    t = jnp.where(mask, t, 0.0)              # kill OOB garbage (NaN-safe)

    # Per-row dot p_i = Σ_h x0·x3 (lane-sparse; only needed for Σp²).
    p = jnp.sum(z, axis=-1, keepdims=True)   # (tile_n, 1)
    spp = jnp.sum(p * p)

    if h < 128:
        # Small H: reduce the dense tile directly instead of the 1/128-lane
        # p vector (halves the lane-sparse VPU/XLU side-work).
        sp = jnp.sum(z)
        spt = jnp.sum(z * t)
    else:
        sp = jnp.sum(p)
        spt = jnp.sum(p * t)

    # Pack the three scalar moments into lanes 0..2 of a single (1, 8, 128)
    # accumulator tile (one unmasked writeback instead of several (1,1) ones).
    sub = jax.lax.broadcasted_iota(jnp.int32, (1, 8, 128), 1)
    lane = jax.lax.broadcasted_iota(jnp.int32, (1, 8, 128), 2)
    row0 = sub == 0
    upd = (jnp.where(row0 & (lane == 0), sp, 0.0)
           + jnp.where(row0 & (lane == 1), spp, 0.0)
           + jnp.where(row0 & (lane == 2), spt, 0.0))
    acc_ref[...] += upd


def _round_up(x, m):
    return ((x + m - 1) // m) * m


def _round_down(x, m):
    return (x // m) * m


def _vmem_capacity_bytes():
    try:
        return int(pltpu.get_tpu_info().vmem_capacity_bytes)
    except Exception:
        return 64 << 20  # conservative fallback (v7x per-TC VMEM)


def _pick_tile_n(n_rows, h, itemsize, vmem_budget_bytes):
    # Per-row VMEM: double-buffered DMA tiles *plus* the f32 compute
    # temporaries (z = x0*x3, and f32 cast copies for sub-32-bit inputs).
    per_row = (2 * h * itemsize * 2            # x0 + x3, double buffered
               + 2 * 128 * 4                   # yTrue tile, lane-padded, 2 bufs
               + h * 4                         # z temporary (f32)
               + (2 * h * 4 if itemsize < 4 else 0))  # f32 cast copies (bf16)
    tile = max(1, vmem_budget_bytes // per_row)

    sublane = max(8, 32 // itemsize)           # 8 (f32) / 16 (bf16) / 32 (int8)
    if tile >= 512:
        tile = _round_down(tile, 512)          # >= roofline knee, layout-clean
    else:
        tile = max(sublane, _round_down(tile, sublane))
    tile = min(tile, 8192)                     # diminishing returns past ~8K

    # No point in tiles larger than one core's share of the rows.
    rows_per_core = _round_up(pl.cdiv(n_rows, NUM_CORE_SPLITS), sublane)
    tile = min(tile, max(sublane, rows_per_core))
    return int(tile)


def cmalkge_forward(yPred, yTrue, means=None):
    """JAX/Pallas equivalent of CMALKGE.forward. Returns a scalar f32 array."""
    del means  # unused by the reference forward
    x0, x3 = yPred[0], yPred[3]
    h = x0.shape[-1]
    x0f = x0.reshape(-1, h)
    x3f = x3.reshape(-1, h)
    tf = yTrue.reshape(-1, 1)
    n_rows = x0f.shape[0]
    itemsize = jnp.dtype(x0f.dtype).itemsize

    vmem_cap = _vmem_capacity_bytes()
    # ~half of physical VMEM for the pipelined tiles; the rest is headroom for
    # temporaries + accumulator (64 MiB on v5e/v6e, 32 MiB on v7x).
    tile_budget = vmem_cap // 2
    tile_n = _pick_tile_n(n_rows, h, itemsize, tile_budget)

    total_blocks = pl.cdiv(n_rows, tile_n)
    blocks_per_core = pl.cdiv(total_blocks, NUM_CORE_SPLITS)
    last_block = total_blocks - 1

    def in_map(c, i):
        g = c * blocks_per_core + i
        # Clamp out-of-range steps to the last real block; the kernel masks
        # their contribution to zero.  Avoids any jnp.pad HBM copy.
        return (jnp.minimum(g, last_block), 0)

    kernel = functools.partial(
        _kge_moments_kernel,
        n_rows=n_rows, tile_n=tile_n, blocks_per_core=blocks_per_core, h=h)

    # TODO(synk): for very large H (per-row VMEM forcing tile_n below ~512),
    # add an inner grid axis over H with a (tile_n, 1) f32 partial-dot scratch,
    # folding the moments only on the last H block.
    acc = pl.pallas_call(
        kernel,
        out_shape=jax.ShapeDtypeStruct((NUM_CORE_SPLITS, 8, 128), jnp.float32),
        grid=(NUM_CORE_SPLITS, blocks_per_core),
        in_specs=[
            pl.BlockSpec((tile_n, h), in_map),
            pl.BlockSpec((tile_n, h), in_map),
            pl.BlockSpec((tile_n, 1), in_map),
        ],
        out_specs=pl.BlockSpec((1, 8, 128), lambda c, i: (c, 0, 0)),
        compiler_params=pltpu.CompilerParams(
            # row-split axis runs on both v7x TensorCores; the accumulation
            # axis carries a resident accumulator -> serial.
            dimension_semantics=("parallel", "arbitrary"),
            vmem_limit_bytes=int(min(vmem_cap * 3 // 4, 112 << 20)),
        ),
        cost_estimate=pl.CostEstimate(
            flops=3 * n_rows * h + 6 * n_rows,
            transcendentals=0,
            bytes_accessed=(2 * n_rows * h * itemsize + n_rows * 4
                            + NUM_CORE_SPLITS * 8 * 128 * 4),
        ),
    )(x0f, x3f, tf)

    # Combine per-core partial moments, then finalize in plain JAX.
    moments = jnp.sum(acc, axis=0)                 # (8, 128)
    sp, spp, spt = moments[0, 0], moments[0, 1], moments[0, 2]

    # yTrue-only moments cost 4N bytes -> cheap XLA reductions in the wrapper.
    t32 = tf.astype(jnp.float32)
    st = jnp.sum(t32)
    stt = jnp.sum(t32 * t32)

    # TODO(synk): single-pass raw moments can lose precision for huge N or a
    # large mean/spread ratio; switch to mean-shifted / Kahan accumulation if
    # validation against the torch reference shows drift.
    n = jnp.float32(n_rows)
    mean_p = sp / n
    mean_t = st / n
    ss_p = spp - sp * sp / n
    ss_t = stt - st * st / n
    cov = spt - sp * st / n

    r = cov / jnp.sqrt(ss_p * ss_t)       # scipy.stats.pearsonr r
    alpha = jnp.sqrt(ss_p / ss_t)         # std(p)/std(t); ddof cancels
    beta = mean_p / mean_t

    value = 1.0 - jnp.sqrt((r - 1.0) ** 2 + (alpha - 1.0) ** 2 + (beta - 1.0) ** 2)
    # torch.nan_to_num(value, 0, 0, 0)
    value = jnp.nan_to_num(value, nan=0.0, posinf=0.0, neginf=0.0)
    return value


if __name__ == "__main__":
    key = jax.random.PRNGKey(0)
    k0, k1, k2, k3, k4 = jax.random.split(key, 5)

    B, S, H = 2, 8, 32
    # yPred is a sequence of 4 tensors; only [0] and [3] are used by forward.
    yPred = (
        jax.random.normal(k0, (B, S, H), dtype=jnp.float32),
        jax.random.normal(k1, (B, S, H), dtype=jnp.float32),
        jax.random.normal(k2, (B, S, H), dtype=jnp.float32),
        jax.random.normal(k3, (B, S, H), dtype=jnp.float32),
    )
    yTrue = jax.random.normal(k4, (B, S), dtype=jnp.float32)

    value = cmalkge_forward(yPred, yTrue)
    jax.block_until_ready(value)
    result = float(value)  # mirrors `.item()` — host-side scalar extraction
    print("KERNEL_OK")
</pallas_src>

<mosaic_0001>
module attributes {stable_mosaic.version = 11 : i64} {
  func.func @_kge_moments_kernel(%arg0: i32, %arg1: i32, %arg2: memref<8x32xf32, #tpu.memory_space<vmem>>, %arg3: memref<8x32xf32, #tpu.memory_space<vmem>>, %arg4: memref<8x1xf32, #tpu.memory_space<vmem>>, %arg5: memref<1x8x128xf32, #tpu.memory_space<vmem>>) attributes {dimension_semantics = [#tpu.dimension_semantics<parallel>, #tpu.dimension_semantics<arbitrary>], iteration_bounds = array<i64: 2, 1>, scalar_prefetch = 0 : i64, scratch_operands = 0 : i64, tpu.core_type = #tpu.core_type<tc>, window_params = [{transform_indices = @transform_0, window_bounds = array<i64: 8, 32>}, {transform_indices = @transform_1, window_bounds = array<i64: 8, 32>}, {transform_indices = @transform_2, window_bounds = array<i64: 8, 1>}, {transform_indices = @transform_3, window_bounds = array<i64: 1, 8, 128>}]} {
    %c0_i32 = arith.constant 0 : i32
    %0 = arith.cmpi eq, %arg1, %c0_i32 : i32
    %1 = arith.extui %0 : i1 to i32
    %c0_i32_0 = arith.constant 0 : i32
    %2 = arith.cmpi ne, %1, %c0_i32_0 : i32
    scf.if %2 {
      %cst_23 = arith.constant 0.000000e+00 : f32
      %64 = vector.broadcast %cst_23 : f32 to vector<1x8x128xf32>
      %c0_24 = arith.constant 0 : index
      %c0_25 = arith.constant 0 : index
      %c0_26 = arith.constant 0 : index
      %65 = vector.load %arg5[%c0_24, %c0_25, %c0_26] : memref<1x8x128xf32, #tpu.memory_space<vmem>>, vector<1x8x128xf32>
      tpu.vector_store %arg5[%c0_24, %c0_25, %c0_26], %64 {strides = array<i32>} : memref<1x8x128xf32, #tpu.memory_space<vmem>>, vector<1x8x128xf32>,
    } else {
    }
    %c1_i32 = arith.constant 1 : i32
    %3 = arith.muli %arg0, %c1_i32 : i32
    %4 = arith.addi %3, %arg1 : i32
    %c8_i32 = arith.constant 8 : i32
    %5 = arith.muli %4, %c8_i32 : i32
    %c16_i32 = arith.constant 16 : i32
    %6 = arith.subi %c16_i32, %5 : i32
    %c0 = arith.constant 0 : index
    %c0_1 = arith.constant 0 : index
    %7 = vector.load %arg2[%c0, %c0_1] : memref<8x32xf32, #tpu.memory_space<vmem>>, vector<8x32xf32>
    %c0_2 = arith.constant 0 : index
    %c0_3 = arith.constant 0 : index
    %8 = vector.load %arg3[%c0_2, %c0_3] : memref<8x32xf32, #tpu.memory_space<vmem>>, vector<8x32xf32>
    %c0_4 = arith.constant 0 : index
    %c0_5 = arith.constant 0 : index
    %9 = vector.load %arg4[%c0_4, %c0_5] : memref<8x1xf32, #tpu.memory_space<vmem>>, vector<8x1xf32>
    %10 = tpu.iota {dimensions = array<i32: 0>} : vector<8x1xi32>
    %11 = vector.broadcast %6 : i32 to vector<8x1xi32>
    %12 = arith.cmpi slt, %10, %11 : vector<8x1xi32>
    %13 = arith.mulf %7, %8 : vector<8x32xf32>
    %cst = arith.constant 0.000000e+00 : f32
    %14 = vector.shape_cast %12 : vector<8x1xi1> to vector<8x1xi1>
    %15 = vector.broadcast %14 : vector<8x1xi1> to vector<8x32xi1>
    %16 = vector.broadcast %cst : f32 to vector<8x32xf32>
    %17 = arith.select %15, %13, %16 : vector<8x32xi1>, vector<8x32xf32>
    %cst_6 = arith.constant 0.000000e+00 : f32
    %18 = vector.broadcast %cst_6 : f32 to vector<8x1xf32>
    %19 = arith.select %12, %9, %18 : vector<8x1xi1>, vector<8x1xf32>
    %cst_7 = arith.constant dense<0.000000e+00> : vector<8xf32>
    %20 = vector.multi_reduction <add>, %17, %cst_7 [1] : vector<8x32xf32> to vector<8xf32>
    %21 = vector.shape_cast %20 : vector<8xf32> to vector<8x1xf32>
    %22 = arith.mulf %21, %21 : vector<8x1xf32>
    %23 = vector.shape_cast %22 : vector<8x1xf32> to vector<1x8x1xf32>
    %cst_8 = arith.constant dense<0.000000e+00> : vector<1xf32>
    %24 = vector.multi_reduction <add>, %23, %cst_8 [1, 2] : vector<1x8x1xf32> to vector<1xf32>
    %25 = vector.shape_cast %24 : vector<1xf32> to vector<1x1x1xf32>
    %26 = vector.extract %25[0, 0, 0] : f32 from vector<1x1x1xf32>
    %27 = vector.shape_cast %17 : vector<8x32xf32> to vector<1x8x32xf32>
    %cst_9 = arith.constant dense<0.000000e+00> : vector<1xf32>
    %28 = vector.multi_reduction <add>, %27, %cst_9 [1, 2] : vector<1x8x32xf32> to vector<1xf32>
    %29 = vector.shape_cast %28 : vector<1xf32> to vector<1x1x1xf32>
    %30 = vector.extract %29[0, 0, 0] : f32 from vector<1x1x1xf32>
    %31 = vector.broadcast %19 : vector<8x1xf32> to vector<8x32xf32>
    %32 = arith.mulf %17, %31 : vector<8x32xf32>
    %33 = vector.shape_cast %32 : vector<8x32xf32> to vector<1x8x32xf32>
    %cst_10 = arith.constant dense<0.000000e+00> : vector<1xf32>
    %34 = vector.multi_reduction <add>, %33, %cst_10 [1, 2] : vector<1x8x32xf32> to vector<1xf32>
    %35 = vector.shape_cast %34 : vector<1xf32> to vector<1x1x1xf32>
    %36 = vector.extract %35[0, 0, 0] : f32 from vector<1x1x1xf32>
    %37 = tpu.iota {dimensions = array<i32: 1>} : vector<1x8x128xi32>
    %38 = tpu.iota {dimensions = array<i32: 2>} : vector<1x8x128xi32>
    %c0_i32_11 = arith.constant 0 : i32
    %39 = vector.broadcast %c0_i32_11 : i32 to vector<1x8x128xi32>
    %40 = arith.cmpi eq, %37, %39 : vector<1x8x128xi32>
    %c0_i32_12 = arith.constant 0 : i32
    %41 = vector.broadcast %c0_i32_12 : i32 to vector<1x8x128xi32>
    %42 = arith.cmpi eq, %38, %41 : vector<1x8x128xi32>
    %43 = arith.andi %40, %42 : vector<1x8x128xi1>
    %cst_13 = arith.constant 0.000000e+00 : f32
    %44 = vector.broadcast %30 : f32 to vector<1x8x128xf32>
    %45 = vector.broadcast %cst_13 : f32 to vector<1x8x128xf32>
    %46 = arith.select %43, %44, %45 : vector<1x8x128xi1>, vector<1x8x128xf32>
    %c1_i32_14 = arith.constant 1 : i32
    %47 = vector.broadcast %c1_i32_14 : i32 to vector<1x8x128xi32>
    %48 = arith.cmpi eq, %38, %47 : vector<1x8x128xi32>
    %49 = arith.andi %40, %48 : vector<1x8x128xi1>
    %cst_15 = arith.constant 0.000000e+00 : f32
    %50 = vector.broadcast %26 : f32 to vector<1x8x128xf32>
    %51 = vector.broadcast %cst_15 : f32 to vector<1x8x128xf32>
    %52 = arith.select %49, %50, %51 : vector<1x8x128xi1>, vector<1x8x128xf32>
    %53 = arith.addf %46, %52 : vector<1x8x128xf32>
    %c2_i32 = arith.constant 2 : i32
    %54 = vector.broadcast %c2_i32 : i32 to vector<1x8x128xi32>
    %55 = arith.cmpi eq, %38, %54 : vector<1x8x128xi32>
    %56 = arith.andi %40, %55 : vector<1x8x128xi1>
    %cst_16 = arith.constant 0.000000e+00 : f32
    %57 = vector.broadcast %36 : f32 to vector<1x8x128xf32>
    %58 = vector.broadcast %cst_16 : f32 to vector<1x8x128xf32>
    %59 = arith.select %56, %57, %58 : vector<1x8x128xi1>, vector<1x8x128xf32>
    %60 = arith.addf %53, %59 : vector<1x8x128xf32>
    %c0_17 = arith.constant 0 : index
    %c0_18 = arith.constant 0 : index
    %c0_19 = arith.constant 0 : index
    %61 = vector.load %arg5[%c0_17, %c0_18, %c0_19] : memref<1x8x128xf32, #tpu.memory_space<vmem>>, vector<1x8x128xf32>
    %62 = arith.addf %61, %60 : vector<1x8x128xf32>
    %c0_20 = arith.constant 0 : index
    %c0_21 = arith.constant 0 : index
    %c0_22 = arith.constant 0 : index
    %63 = vector.load %arg5[%c0_20, %c0_21, %c0_22] : memref<1x8x128xf32, #tpu.memory_space<vmem>>, vector<1x8x128xf32>
    tpu.vector_store %arg5[%c0_20, %c0_21, %c0_22], %62 {strides = array<i32>} : memref<1x8x128xf32, #tpu.memory_space<vmem>>, vector<1x8x128xf32>,
    return
  }
  func.func @transform_0(%arg0: i32, %arg1: i32) -> (i32, i32) {
    %c1_i32 = arith.constant 1 : i32
    %0 = arith.muli %arg0, %c1_i32 : i32
    %1 = arith.addi %0, %arg1 : i32
    %c1_i32_0 = arith.constant 1 : i32
    %2 = arith.minsi %1, %c1_i32_0 : i32
    %c0_i32 = arith.constant 0 : i32
    %c0_i32_1 = arith.constant 0 : i32
    return %2, %c0_i32 : i32, i32
  }
  func.func @transform_1(%arg0: i32, %arg1: i32) -> (i32, i32) {
    %c1_i32 = arith.constant 1 : i32
    %0 = arith.muli %arg0, %c1_i32 : i32
    %1 = arith.addi %0, %arg1 : i32
    %c1_i32_0 = arith.constant 1 : i32
    %2 = arith.minsi %1, %c1_i32_0 : i32
    %c0_i32 = arith.constant 0 : i32
    %c0_i32_1 = arith.constant 0 : i32
    return %2, %c0_i32 : i32, i32
  }
  func.func @transform_2(%arg0: i32, %arg1: i32) -> (i32, i32) {
    %c1_i32 = arith.constant 1 : i32
    %0 = arith.muli %arg0, %c1_i32 : i32
    %1 = arith.addi %0, %arg1 : i32
    %c1_i32_0 = arith.constant 1 : i32
    %2 = arith.minsi %1, %c1_i32_0 : i32
    %c0_i32 = arith.constant 0 : i32
    %c0_i32_1 = arith.constant 0 : i32
    return %2, %c0_i32 : i32, i32
  }
  func.func @transform_3(%arg0: i32, %arg1: i32) -> (i32, i32, i32) {
    %c0_i32 = arith.constant 0 : i32
    %c0_i32_0 = arith.constant 0 : i32
    %c0_i32_1 = arith.constant 0 : i32
    return %arg0, %c0_i32, %c0_i32_0 : i32, i32, i32
  }
}

</mosaic_0001>

<llo_original>
// kernel: tpu_custom_call.1
$region0: #{tpu_custom_call.1}
  #allocation0 [shape = 'u32[]', space=smem, size = 0x4, offset = 0x4, fixed_abs, tag = 'smem constant byte address 0x4 - core index']
  #allocation1 [shape = 'u32[144,128]{1,0:T(1,128)}', space=vmem, size = 0x12000, scoped, tag = 'internal scratch']
  %s0 = inlined_call_operand.vmem [shape: f32[16,32], index: 0, kind: input, shape index: {}]
  %s1 = inlined_call_operand.hbm [shape: f32[16,32], index: 1, kind: input, shape index: {}]
  %s2 = inlined_call_operand.vmem [shape: f32[16,1], index: 2, kind: input, shape index: {}]
  %s3 = inlined_call_operand.hbm [shape: f32[2,8,128], index: 3, kind: output, shape index: {}]
  %s4 = sld [smem:[#allocation0]]
  $region53: #{tpu_custom_call.1} parent=0
    _
  %s6 = ssub.s32 1, %s4
  %s7 = scalar_select 0, %s6, %s4
  $region1: #{tpu_custom_call.1} parent=0
    #allocation2 [shape = 'u8[8192]{0}', space=vmem, size = 0x2000, scoped, tag = 'input window, operand 1']
    #allocation3 [shape = 's32[2]{0}', space=sflag, size = 0x8, scoped, tag = 'scoped memory for tpu_custom_call.1']
    #allocation4 [shape = 's32[2]{0}', space=sflag, size = 0x8, scoped, tag = 'scoped memory for tpu_custom_call.1']
    #allocation5 [shape = 'u8[8192]{0}', space=vmem, size = 0x2000, scoped, tag = 'output window, operand 0']
    %8 = vsyncpa [#allocation3], 0
    %s9 = scalar_lea.sflag [#allocation3], 1
    %10 = vsyncpa %s9, 0
    %11 = vsyncpa [#allocation4], 0
    %s12 = scalar_lea.sflag [#allocation4], 1
    %13 = vsyncpa %s12, 0
    loop: start=0, step=1, limit=4
    $region2: #{tpu_custom_call.1} parent=1 // loop_pre_header
      _
    $region3: #{tpu_custom_call.1} parent=1 // loop_header
      %s15 = sphi 0, %s19
      %p16 = scmp.ge.s32.totalorder %s15, 4
      %s22 = sphi 0, %s34
      %s23 = sphi 0, %s30
      %s24 = sphi 0, %s22
      %s25 = sphi 0, %s23
      %s26 = sphi 0, %s24
      %s27 = sphi 0, %s25
      %s43 = sphi 0, %s45
      %s46 = sphi 0, %s43
      %s47 = sphi 0, %s46
      %s63 = sphi 0, %s47
      %s75 = sphi 0, %s77
      %s78 = sphi 0, %s75
      %s79 = sphi 0, %s78
      %s95 = sphi 0, %s79
      %s107 = sphi 0, %s109
      %s110 = sphi 0, %s107
      %s111 = sphi 0, %s110
      %s127 = sphi 0, %s111
      %s133 = sphi 0, %s135
      %s136 = sphi 0, %s133
      %s137 = sphi 0, %s136
      %s153 = sphi 0, %s137
    $region4: #{tpu_custom_call.1} parent=1 // loop_header_branch
      %18 = sbr.rel (%p16) target = $region8
    $region5: #{tpu_custom_call.1} parent=1 // loop_body
      %s20 = ssub.s32 %s15, 1
      %s21 = ssub.s32 %s15, 2
      %s28 = sadd.s32 1, %s23
      %p29 = scmp.ge.s32.totalorder %s28, 1
      %s30 = scalar_select %p29, 0, %s28
      %s31 = sadd.s32 1, %s22
      %s32 = scalar_select %p29, %s31, %s22
      %p33 = scmp.ge.s32.totalorder %s32, 2
      %s34 = scalar_select %p33, 0, %s32
      %s35 = sadd.s32 %s22, %s23
      %p36 = scmp.lt.s32.totalorder %s35, 1
      %s37 = scalar_select %p36, %s35, 1
      %s38 = sadd.s32 %s34, %s30
      %p39 = scmp.lt.s32.totalorder %s38, 1
      %s40 = scalar_select %p39, %s38, 1
      %s41 = ssub.s32 %s37, %s40
      %p42 = scmp.eq.s32.totalorder %s41, 0
      %s44 = sadd.s32 %s43, 1
      %s45 = scalar_select %p42, %s43, %s44
      %p48 = pneg %p42
      %p49 = scmp.eq.s32.totalorder %s15, 1
      %p50 = por %p48, %p49
      %p51 = scmp.ne.s32.totalorder %s43, %s46
      %p52 = scmp.eq.s32.totalorder %s15, 0
      %p53 = por %p51, %p52
      %p54 = scmp.ne.s32.totalorder %s43, %s46
      %p55 = scmp.eq.s32.totalorder %s20, 1
      %p56 = por %p54, %p55
      %p57 = scmp.ne.s32.totalorder %s46, %s47
      %p58 = scmp.eq.s32.totalorder %s20, 0
      %p59 = por %p57, %p58
      %p60 = scmp.ne.s32.totalorder %s46, %s47
      %p61 = scmp.eq.s32.totalorder %s21, 1
      %p62 = por %p60, %p61
      %p64 = scmp.ne.s32.totalorder %s47, %s63
      %p65 = scmp.eq.s32.totalorder %s21, 0
      %p66 = por %p64, %p65
      %s67 = sadd.s32 %s22, %s23
      %p68 = scmp.lt.s32.totalorder %s67, 1
      %s69 = scalar_select %p68, %s67, 1
      %s70 = sadd.s32 %s34, %s30
      %p71 = scmp.lt.s32.totalorder %s70, 1
      %s72 = scalar_select %p71, %s70, 1
      %s73 = ssub.s32 %s69, %s72
      %p74 = scmp.eq.s32.totalorder %s73, 0
      %s76 = sadd.s32 %s75, 1
      %s77 = scalar_select %p74, %s75, %s76
      %p80 = pneg %p74
      %p81 = scmp.eq.s32.totalorder %s15, 1
      %p82 = por %p80, %p81
      %p83 = scmp.ne.s32.totalorder %s75, %s78
      %p84 = scmp.eq.s32.totalorder %s15, 0
      %p85 = por %p83, %p84
      %p86 = scmp.ne.s32.totalorder %s75, %s78
      %p87 = scmp.eq.s32.totalorder %s20, 1
      %p88 = por %p86, %p87
      %p89 = scmp.ne.s32.totalorder %s78, %s79
      %p90 = scmp.eq.s32.totalorder %s20, 0
      %p91 = por %p89, %p90
      %p92 = scmp.ne.s32.totalorder %s78, %s79
      %p93 = scmp.eq.s32.totalorder %s21, 1
      %p94 = por %p92, %p93
      %p96 = scmp.ne.s32.totalorder %s79, %s95
      %p97 = scmp.eq.s32.totalorder %s21, 0
      %p98 = por %p96, %p97
      %s99 = sadd.s32 %s22, %s23
      %p100 = scmp.lt.s32.totalorder %s99, 1
      %s101 = scalar_select %p100, %s99, 1
      %s102 = sadd.s32 %s34, %s30
      %p103 = scmp.lt.s32.totalorder %s102, 1
      %s104 = scalar_select %p103, %s102, 1
      %s105 = ssub.s32 %s101, %s104
      %p106 = scmp.eq.s32.totalorder %s105, 0
      %s108 = sadd.s32 %s107, 1
      %s109 = scalar_select %p106, %s107, %s108
      %p112 = pneg %p106
      %p113 = scmp.eq.s32.totalorder %s15, 1
      %p114 = por %p112, %p113
      %p115 = scmp.ne.s32.totalorder %s107, %s110
      %p116 = scmp.eq.s32.totalorder %s15, 0
      %p117 = por %p115, %p116
      %p118 = scmp.ne.s32.totalorder %s107, %s110
      %p119 = scmp.eq.s32.totalorder %s20, 1
      %p120 = por %p118, %p119
      %p121 = scmp.ne.s32.totalorder %s110, %s111
      %p122 = scmp.eq.s32.totalorder %s20, 0
      %p123 = por %p121, %p122
      %p124 = scmp.ne.s32.totalorder %s110, %s111
      %p125 = scmp.eq.s32.totalorder %s21, 1
      %p126 = por %p124, %p125
      %p128 = scmp.ne.s32.totalorder %s111, %s127
      %p129 = scmp.eq.s32.totalorder %s21, 0
      %p130 = por %p128, %p129
      %s131 = ssub.s32 %s22, %s34
      %p132 = scmp.eq.s32.totalorder %s131, 0
      %s134 = sadd.s32 %s133, 1
      %s135 = scalar_select %p132, %s133, %s134
      %p138 = pneg %p132
      %p139 = scmp.eq.s32.totalorder %s15, 1
      %p140 = por %p138, %p139
      %p141 = scmp.ne.s32.totalorder %s133, %s136
      %p142 = scmp.eq.s32.totalorder %s15, 0
      %p143 = por %p141, %p142
      %p144 = scmp.ne.s32.totalorder %s133, %s136
      %p145 = scmp.eq.s32.totalorder %s20, 1
      %p146 = por %p144, %p145
      %p147 = scmp.ne.s32.totalorder %s136, %s137
      %p148 = scmp.eq.s32.totalorder %s20, 0
      %p149 = por %p147, %p148
      %p150 = scmp.ne.s32.totalorder %s136, %s137
      %p151 = scmp.eq.s32.totalorder %s21, 1
      %p152 = por %p150, %p151
      %p154 = scmp.ne.s32.totalorder %s137, %s153
      %p155 = scmp.eq.s32.totalorder %s21, 0
      %p156 = por %p154, %p155
      %p157 = scmp.le.s32.totalorder 1, %s15
      %p158 = scmp.lt.s32.totalorder %s15, 3
      %p159 = pnand %p157, %p158
      %p160 = pneg %p159
      // Predicated region
      $region9: #{tpu_custom_call.1} parent=5 // pred_check
        _
      $region10: #{tpu_custom_call.1} parent=5 // pred_check_branch
        %162 = sbr.rel (%p159) target = $region12
      $region11: #{tpu_custom_call.1} parent=5 // pred_region
        %s163 = ssub.s32 %s15, 1
      $region12: #{tpu_custom_call.1} parent=5 // pred_fallthru
        _
      %p164 = scmp.lt.s32.totalorder %s15, 2
      // Predicated region
      $region13: #{tpu_custom_call.1} parent=5 // pred_check
        %p165 = pneg %p164
      $region14: #{tpu_custom_call.1} parent=5 // pred_check_branch
        %167 = sbr.rel (%p165) target = $region16
      $region15: #{tpu_custom_call.1} parent=5 // pred_region
        // Predicated region
        $region17: #{tpu_custom_call.1} parent=15 // pred_check
          %p168 = pneg %p53
        $region18: #{tpu_custom_call.1} parent=15 // pred_check_branch
          %170 = sbr.rel (%p168) target = $region20
        $region19: #{tpu_custom_call.1} parent=15 // pred_region
          %s171 = sadd.s32 %s22, %s23
          %p172 = scmp.lt.s32.totalorder %s171, 1
          %s173 = scalar_select %p172, %s171, 1
          %p174 = scmp.lt.s32.totalorder %s173, 1
          %s175 = scalar_select %p174, %s173, 1
          %s176 = smul.addr %s175, 8
          %s177 = scalar_lea.vmem %s0, %s176
          %s178 = sadd.s32 %s22, %s23
          %p179 = scmp.lt.s32.totalorder %s178, 1
          %s180 = scalar_select %p179, %s178, 1
        $region20: #{tpu_custom_call.1} parent=15 // pred_fallthru
          _
        // Predicated region
        $region21: #{tpu_custom_call.1} parent=15 // pred_check
          %p181 = pneg %p85
        $region22: #{tpu_custom_call.1} parent=15 // pred_check_branch
          %183 = sbr.rel (%p181) target = $region24
        $region23: #{tpu_custom_call.1} parent=15 // pred_region
          %s184 = sand.u32 %s75, 1
          %s185 = scalar_lea.sflag [#allocation3], %s184
          %s186 = sand.u32 %s75, 1
          %s187 = smul.addr %s186, 8
          %s188 = scalar_lea.vmem [#allocation2], %s187
          %s189 = sadd.s32 %s22, %s23
          %p190 = scmp.lt.s32.totalorder %s189, 1
          %s191 = scalar_select %p190, %s189, 1
          %s193 = ssub.s32 128, 128
          %194 = vsyncadd %s185, %s193
          %s195 = smul.addr %s191, 128
          %s196 = scalar_lea.hbm %s1, %s195
          %s198 = sshll.u32 %s188, 4
          %s199 = int_to_ptr.vmem [resolvable:$true] %s198
          %201 = dma.hbm_to_vmem [thread:$0]  %s196, 128, %s199, %s185
        $region24: #{tpu_custom_call.1} parent=15 // pred_fallthru
          _
        // Predicated region
        $region25: #{tpu_custom_call.1} parent=15 // pred_check
          %p202 = pneg %p117
        $region26: #{tpu_custom_call.1} parent=15 // pred_check_branch
          %204 = sbr.rel (%p202) target = $region28
        $region27: #{tpu_custom_call.1} parent=15 // pred_region
          %s205 = sadd.s32 %s22, %s23
          %p206 = scmp.lt.s32.totalorder %s205, 1
          %s207 = scalar_select %p206, %s205, 1
          %p208 = scmp.lt.s32.totalorder %s207, 1
          %s209 = scalar_select %p208, %s207, 1
          %s210 = smul.addr %s209, 8
          %s211 = scalar_lea.vmem %s2, %s210
          %s212 = sadd.s32 %s22, %s23
          %p213 = scmp.lt.s32.totalorder %s212, 1
          %s214 = scalar_select %p213, %s212, 1
        $region28: #{tpu_custom_call.1} parent=15 // pred_fallthru
          _
      $region16: #{tpu_custom_call.1} parent=5 // pred_fallthru
        _
      %p215 = scmp.le.s32.totalorder 1, %s15
      %p216 = scmp.lt.s32.totalorder %s15, 3
      %p217 = pnand %p215, %p216
      %p218 = pneg %p217
      // Predicated region
      $region29: #{tpu_custom_call.1} parent=5 // pred_check
        _
      $region30: #{tpu_custom_call.1} parent=5 // pred_check_branch
        %220 = sbr.rel (%p217) target = $region32
      $region31: #{tpu_custom_call.1} parent=5 // pred_region
        %s221 = ssub.s32 %s15, 1
        %s222 = sand.u32 %s78, 1
        %s223 = scalar_lea.sflag [#allocation3], %s222
        %s224 = sand.u32 %s78, 1
        %s225 = smul.addr %s224, 8
        %s226 = scalar_lea.vmem [#allocation2], %s225
        // Predicated region
        $region33: #{tpu_custom_call.1} parent=31 // pred_check
          %p227 = pneg %p91
        $region34: #{tpu_custom_call.1} parent=31 // pred_check_branch
          %229 = sbr.rel (%p227) target = $region36
        $region35: #{tpu_custom_call.1} parent=31 // pred_region
          %230 = dma.done %s223, 128
        $region36: #{tpu_custom_call.1} parent=31 // pred_fallthru
          _
        %s231 = sadd.s32 %s24, %s25
        %p232 = scmp.lt.s32.totalorder %s231, 1
        %s233 = scalar_select %p232, %s231, 1
        %p234 = scmp.lt.s32.totalorder %s233, 1
        %s235 = scalar_select %p234, %s233, 1
        %s236 = smul.addr %s235, 8
        %s237 = scalar_lea.vmem %s0, %s236
        %p238 = pneg %p59
        %p239 = pneg %p56
        %s240 = sand.u32 %s78, 1
        %s241 = scalar_lea.sflag [#allocation3], %s240
        %s242 = sand.u32 %s78, 1
        %s243 = smul.addr %s242, 8
        %s244 = scalar_lea.vmem [#allocation2], %s243
        %p245 = pneg %p91
        %p246 = pneg %p88
        %s247 = sadd.s32 %s24, %s25
        %p248 = scmp.lt.s32.totalorder %s247, 1
        %s249 = scalar_select %p248, %s247, 1
        %p250 = scmp.lt.s32.totalorder %s249, 1
        %s251 = scalar_select %p250, %s249, 1
        %s252 = smul.addr %s251, 8
        %s253 = scalar_lea.vmem %s2, %s252
        %p254 = pneg %p123
        %p255 = pneg %p120
        %p256 = pneg %p149
        %p257 = pneg %p146
        %s258 = sand.u32 %s136, 1
        %s259 = scalar_lea.sflag [#allocation4], %s258
        %s260 = sand.u32 %s136, 1
        %s261 = smul.addr %s260, 8
        %s262 = scalar_lea.vmem [#allocation5], %s261
        %s263 = sadd.s32 %s24, %s25
        %p264 = scmp.lt.s32.totalorder %s263, 1
        %s265 = scalar_select %p264, %s263, 1
        %p266 = scmp.lt.s32.totalorder %s265, 1
        %s267 = scalar_select %p266, %s265, 1
        %s268 = smul.addr %s267, 8
        %s269 = scalar_lea.vmem %s0, %s268
        %s270 = sadd.s32 %s24, %s25
        %p271 = scmp.lt.s32.totalorder %s270, 1
        %s272 = scalar_select %p271, %s270, 1
        %s273 = sadd.s32 %s24, %s25
        %p274 = scmp.lt.s32.totalorder %s273, 1
        %s275 = scalar_select %p274, %s273, 1
        %s276 = sadd.s32 %s24, %s25
        %p277 = scmp.lt.s32.totalorder %s276, 1
        %s278 = scalar_select %p277, %s276, 1
        %p279 = scmp.lt.s32.totalorder %s278, 1
        %s280 = scalar_select %p279, %s278, 1
        %s281 = smul.addr %s280, 8
        %s282 = scalar_lea.vmem %s2, %s281
        %s283 = sadd.s32 %s24, %s25
        %p284 = scmp.lt.s32.totalorder %s283, 1
        %s285 = scalar_select %p284, %s283, 1
        %p286 = scmp.eq.s32.totalorder %s25, 0
        // Predicated region
        $region37: #{tpu_custom_call.1} parent=31 // pred_check
          %p287 = pneg %p286
        $region38: #{tpu_custom_call.1} parent=31 // pred_check_branch
          %289 = sbr.rel (%p287) target = $region40
        $region39: #{tpu_custom_call.1} parent=31 // pred_region
          %290 = vst [vmem:[%s262] sm:$0xff] 0.0
        $region40: #{tpu_custom_call.1} parent=31 // pred_fallthru
          _
        %s291 = sadd.s32 %s24, %s25
        %s292 = smul.u32 %s291, 8
        %s293 = ssub.s32 16, %s292
        %v294 = vld [vmem:[%s269] sm:$0xff]
        %v295 = vld [vmem:[%s226] sm:$0xff]
        %v296 = vld [vmem:[%s282] sm:$0xff]
        %v297 = vlaneseq
        %v298 = vshrl.u32 %v297, 7
        %v299 = vstv %s293
        %vm300 = vcmp.lt.s32.totalorder %v298, %v299
        %v301 = vmul.f32 %v294, %v295
        %v302 = vsel %vm300, 1, 0
        %vm303 = vcmp.eq.s32.totalorder %v302, 1
        %v304 = vsel %vm303, %v301, 0.0
        %v305 = vsel %vm300, %v296, 0.0
        %vm306 = vcmask 261120
        %v307 = vsel %vm306, %v304, 0.0
        %308 = vadd.xlane.f32.xlu0 %v307
        %v309 = vpop.xlane.xlu0 %308
        %v310 = vmul.f32 %v309, %v309
        %vm311 = vcmask 7168
        %v312 = vsel %vm311, %v310, 0.0
        %313 = vadd.xlane.f32.xlu0 %v312
        %v314 = vpop.xlane.xlu0 %313
        %v315 = vrot.slane %v314, 4
        %v316 = vadd.f32 %v314, %v315
        %v317 = vrot.slane %v316, 2
        %v318 = vadd.f32 %v316, %v317
        %v319 = vrot.slane %v318, 1
        %v320 = vadd.f32 %v318, %v319
        %s321 = vtos %v320
        %v322 = vrot.slane %v309, 4
        %v323 = vadd.f32 %v309, %v322
        %v324 = vrot.slane %v323, 2
        %v325 = vadd.f32 %v323, %v324
        %v326 = vrot.slane %v325, 1
        %v327 = vadd.f32 %v325, %v326
        %s328 = vtos %v327
        %330 = vset.pattern.permute.xlu0 0
        %331 = vperm.xlu0 %330, %v305
        %v332 = vpop.permute.xlu0 %331
        %v334 = vmul.f32 %v304, %v332
        %v335 = vsel %vm306, %v334, 0.0
        %336 = vadd.xlane.f32.xlu0 %v335
        %v337 = vpop.xlane.xlu0 %336
        %v338 = vrot.slane %v337, 4
        %v339 = vadd.f32 %v337, %v338
        %v340 = vrot.slane %v339, 2
        %v341 = vadd.f32 %v339, %v340
        %v342 = vrot.slane %v341, 1
        %v343 = vadd.f32 %v341, %v342
        %s344 = vtos %v343
        %v345 = vlaneseq
        %v346 = vand.u32 %v345, 127
        %vm347 = vcmp.eq.s32.totalorder %v298, 0
        %vm348 = vcmp.eq.s32.totalorder %v346, 0
        %vm349 = vmand %vm347, %vm348
        %v350 = vstv %s328
        %v351 = vsel %vm349, %v350, 0.0
        %vm352 = vcmp.eq.s32.totalorder %v346, 1
        %vm353 = vmand %vm347, %vm352
        %v354 = vstv %s321
        %v355 = vsel %vm353, %v354, 0.0
        %v356 = vadd.f32 %v351, %v355
        %vm357 = vcmp.eq.s32.totalorder %v346, 2
        %vm358 = vmand %vm347, %vm357
        %v359 = vstv %s344
        %v360 = vsel %vm358, %v359, 0.0
        %v361 = vadd.f32 %v356, %v360
        %v362 = vld [vmem:[%s262] sm:$0xff]
        %v363 = vadd.f32 %v362, %v361
        %364 = vst [vmem:[%s262] sm:$0xff] %v363
        %s365 = sand.u32 %s136, 1
        %s366 = scalar_lea.sflag [#allocation4], %s365
        %s367 = sand.u32 %s136, 1
        %s368 = smul.addr %s367, 8
        %s369 = scalar_lea.vmem [#allocation5], %s368
        // Predicated region
        $region41: #{tpu_custom_call.1} parent=31 // pred_check
          %p370 = pneg %p146
        $region42: #{tpu_custom_call.1} parent=31 // pred_check_branch
          %372 = sbr.rel (%p370) target = $region44
        $region43: #{tpu_custom_call.1} parent=31 // pred_region
          %s374 = ssub.s32 128, 128
          %375 = vsyncadd %s366, %s374
          %s376 = smul.addr %s24, 128
          %s377 = scalar_lea.hbm %s3, %s376
          %s379 = sshll.u32 %s369, 4
          %s380 = int_to_ptr.vmem [resolvable:$true] %s379
          %382 = dma.vmem_to_hbm [thread:$0]  %s380, 128, %s377, %s366
        $region44: #{tpu_custom_call.1} parent=31 // pred_fallthru
          _
      $region32: #{tpu_custom_call.1} parent=5 // pred_fallthru
        _
      %p383 = scmp.le.s32.totalorder 2, %s15
      // Predicated region
      $region45: #{tpu_custom_call.1} parent=5 // pred_check
        %p384 = pneg %p383
      $region46: #{tpu_custom_call.1} parent=5 // pred_check_branch
        %386 = sbr.rel (%p384) target = $region48
      $region47: #{tpu_custom_call.1} parent=5 // pred_region
        %s387 = ssub.s32 %s15, 2
        // Predicated region
        $region49: #{tpu_custom_call.1} parent=47 // pred_check
          %p388 = pneg %p152
        $region50: #{tpu_custom_call.1} parent=47 // pred_check_branch
          %390 = sbr.rel (%p388) target = $region52
        $region51: #{tpu_custom_call.1} parent=47 // pred_region
          %s391 = sand.u32 %s137, 1
          %s392 = scalar_lea.sflag [#allocation4], %s391
          %s393 = sand.u32 %s137, 1
          %s394 = smul.addr %s393, 8
          %s395 = scalar_lea.vmem [#allocation5], %s394
          %396 = dma.done %s392, 128
        $region52: #{tpu_custom_call.1} parent=47 // pred_fallthru
          _
      $region48: #{tpu_custom_call.1} parent=5 // pred_fallthru
        _
    $region6: #{tpu_custom_call.1} parent=1 // loop_footer
      %s19 = sadd.s32 1, %s15
    $region7: #{tpu_custom_call.1} parent=1 // loop_footer_branch
      %14 = sbr.rel target = $region3
    $region8: #{tpu_custom_call.1} parent=1 // loop_exit
      _
    %397 = vsyncpa [#allocation3], 1
    %s398 = scalar_lea.sflag [#allocation3], 1
    %399 = vsyncpa %s398, 1
    %400 = vsyncpa [#allocation4], 1
    %s401 = scalar_lea.sflag [#allocation4], 1
    %402 = vsyncpa %s401, 1

</llo_original>
